<compile_context>
chip_gen: v7x
topology: tpu7x:2x2x1
jax: 0.10.0
libtpu: 0.0.40
codegen_flags: <defaults>
</compile_context>

<pallas_src>
import functools

import jax
import jax.numpy as jnp
from jax.experimental import pallas as pl
from jax.experimental.pallas import tpu as pltpu


def _get_pad_size(lrtd_pad):
    if isinstance(lrtd_pad, int):
        return lrtd_pad, lrtd_pad, lrtd_pad, lrtd_pad
    p_l, p_r, p_t, p_d = lrtd_pad
    return int(p_l), int(p_r), int(p_t), int(p_d)


def _zero_pad_kernel(x_ref, o_ref, *, p_l, p_r, p_t, p_d):
    # x_ref: (Cb, H, W)       Cb input planes
    # o_ref: (Cb, H_out, W_out) Cb output planes
    cb, h, w = x_ref.shape
    _, _, w_out = o_ref.shape
    dt = o_ref.dtype

    # Interior: each interior element is stored exactly once (no full-plane
    # zero fill followed by an overwrite).
    o_ref[:, pl.ds(p_t, h), pl.ds(p_l, w)] = x_ref[...]

    # Border slabs. Pads are static Python ints, so empty slabs are pruned at
    # trace time; together with the interior these tile the full output plane.
    if p_t > 0:
        o_ref[:, pl.ds(0, p_t), :] = jnp.zeros((cb, p_t, w_out), dt)
    if p_d > 0:
        o_ref[:, pl.ds(p_t + h, p_d), :] = jnp.zeros((cb, p_d, w_out), dt)
    if p_l > 0:
        o_ref[:, pl.ds(p_t, h), pl.ds(0, p_l)] = jnp.zeros((cb, h, p_l), dt)
    if p_r > 0:
        o_ref[:, pl.ds(p_t, h), pl.ds(p_l + w, p_r)] = jnp.zeros((cb, h, p_r), dt)


def _choose_block_planes(nc, per_plane_bytes, target_tile_bytes):
    """Largest divisor Cb of nc whose (in+out) tile fits target_tile_bytes,
    preferring an even grid length (balances v7x's 2 TensorCores)."""
    max_cb = max(1, target_tile_bytes // max(1, per_plane_bytes))
    divisors = [d for d in range(1, nc + 1) if nc % d == 0]
    best = max(d for d in divisors if d <= max_cb)
    if nc >= 2:
        even = [d for d in divisors if d <= max_cb and (nc // d) % 2 == 0]
        if even:
            best_even = max(even)
            # Only trade down if the block stays within 2x of the largest.
            if best_even * 2 >= best:
                best = best_even
    return best


def zero_pad(x, lrtd_pad):
    """Pallas implementation of ZeroPad.forward (NCHW)."""
    p_l, p_r, p_t, p_d = _get_pad_size(lrtd_pad)
    if p_l == 0 and p_r == 0 and p_t == 0 and p_d == 0:
        return x  # module is an identity when all pads are zero

    N, C, H, W = x.shape
    H_out = H + p_t + p_d
    W_out = W + p_l + p_r
    NC = N * C

    itemsize = jnp.dtype(x.dtype).itemsize
    in_plane_bytes = H * W * itemsize
    out_plane_bytes = H_out * W_out * itemsize
    per_plane_bytes = in_plane_bytes + out_plane_bytes

    # Target ~8 MiB of (in + out) tile per grid step -> ~16 MiB double-buffered,
    # comfortably inside v7x's 64 MiB physical VMEM with headroom, while being
    # large enough to amortize per-step overhead on all generations.
    target_tile_bytes = 8 * 1024 * 1024
    cb = _choose_block_planes(NC, per_plane_bytes, target_tile_bytes)
    grid = (NC // cb,)

    # Explicit VMEM limit: covers double-buffered tiles + internal scratch and
    # raises v5e's 16 MiB scoped default; capped below v7x's 64 MiB physical.
    double_buffered = 2 * cb * per_plane_bytes
    vmem_limit_bytes = int(
        min(60 * 1024 * 1024, max(32 * 1024 * 1024, 2 * double_buffered))
    )

    # TODO(synk): add an H-tiled (row-chunk) fallback for planes so large that
    # even a single (H_out, W_out) plane exceeds the VMEM budget (esp. v7x).

    x_flat = x.reshape(NC, H, W)
    kernel = functools.partial(
        _zero_pad_kernel, p_l=p_l, p_r=p_r, p_t=p_t, p_d=p_d
    )

    out_flat = pl.pallas_call(
        kernel,
        out_shape=jax.ShapeDtypeStruct((NC, H_out, W_out), x.dtype),
        grid_spec=pltpu.PrefetchScalarGridSpec(
            num_scalar_prefetch=0,
            grid=grid,
            in_specs=[
                # Last two block dims equal the full array dims -> no (8,128)
                # divisibility issue.
                pl.BlockSpec((cb, H, W), lambda i: (i, 0, 0)),
            ],
            out_specs=pl.BlockSpec((cb, H_out, W_out), lambda i: (i, 0, 0)),
        ),
        compiler_params=pltpu.CompilerParams(
            dimension_semantics=("parallel",),
            vmem_limit_bytes=vmem_limit_bytes,
        ),
    )(x_flat)

    return out_flat.reshape(N, C, H_out, W_out)


if __name__ == "__main__":
    key = jax.random.PRNGKey(0)
    N, C, H, W = 2, 4, 16, 16
    x = jax.random.normal(key, (N, C, H, W), dtype=jnp.float32)

    # Tuple pads (p_l, p_r, p_t, p_d)
    lrtd_pad = (1, 2, 3, 4)
    out = zero_pad(x, lrtd_pad)
    jax.block_until_ready(out)

    p_l, p_r, p_t, p_d = lrtd_pad
    ref = jnp.pad(x, ((0, 0), (0, 0), (p_t, p_d), (p_l, p_r)))
    assert out.shape == (N, C, H + p_t + p_d, W + p_l + p_r), out.shape
    assert out.dtype == jnp.float32
    assert jnp.array_equal(out, ref), "mismatch vs jnp.pad reference (tuple pad)"

    # Scalar pad path (module also accepts a single int)
    out2 = zero_pad(x, 2)
    jax.block_until_ready(out2)
    ref2 = jnp.pad(x, ((0, 0), (0, 0), (2, 2), (2, 2)))
    assert jnp.array_equal(out2, ref2), "mismatch vs jnp.pad reference (int pad)"

    print("KERNEL_OK")
</pallas_src>

<mosaic_0001>
module attributes {stable_mosaic.version = 11 : i64} {
  func.func @_zero_pad_kernel(%arg0: i32, %arg1: memref<4x16x16xf32, #tpu.memory_space<vmem>>, %arg2: memref<4x23x19xf32, #tpu.memory_space<vmem>>) attributes {dimension_semantics = [#tpu.dimension_semantics<parallel>], iteration_bounds = array<i64: 2>, scalar_prefetch = 0 : i64, scratch_operands = 0 : i64, tpu.core_type = #tpu.core_type<tc>, window_params = [{transform_indices = @transform_0, window_bounds = array<i64: 4, 16, 16>}, {transform_indices = @transform_1, window_bounds = array<i64: 4, 23, 19>}]} {
    %c0 = arith.constant 0 : index
    %c0_0 = arith.constant 0 : index
    %c0_1 = arith.constant 0 : index
    %0 = vector.load %arg1[%c0, %c0_0, %c0_1] : memref<4x16x16xf32, #tpu.memory_space<vmem>>, vector<4x16x16xf32>
    %c0_2 = arith.constant 0 : index
    %c3 = arith.constant 3 : index
    %c1 = arith.constant 1 : index
    %1 = vector.load %arg2[%c0_2, %c3, %c1] : memref<4x23x19xf32, #tpu.memory_space<vmem>>, vector<4x16x16xf32>
    tpu.vector_store %arg2[%c0_2, %c3, %c1], %0 {strides = array<i32>} : memref<4x23x19xf32, #tpu.memory_space<vmem>>, vector<4x16x16xf32>,
    %cst = arith.constant 0.000000e+00 : f32
    %2 = vector.broadcast %cst : f32 to vector<4x3x19xf32>
    %c0_3 = arith.constant 0 : index
    %c0_4 = arith.constant 0 : index
    %c0_5 = arith.constant 0 : index
    %3 = vector.load %arg2[%c0_3, %c0_4, %c0_5] : memref<4x23x19xf32, #tpu.memory_space<vmem>>, vector<4x3x19xf32>
    tpu.vector_store %arg2[%c0_3, %c0_4, %c0_5], %2 {strides = array<i32>} : memref<4x23x19xf32, #tpu.memory_space<vmem>>, vector<4x3x19xf32>,
    %cst_6 = arith.constant 0.000000e+00 : f32
    %4 = vector.broadcast %cst_6 : f32 to vector<4x4x19xf32>
    %c0_7 = arith.constant 0 : index
    %c19 = arith.constant 19 : index
    %c0_8 = arith.constant 0 : index
    %5 = vector.load %arg2[%c0_7, %c19, %c0_8] : memref<4x23x19xf32, #tpu.memory_space<vmem>>, vector<4x4x19xf32>
    tpu.vector_store %arg2[%c0_7, %c19, %c0_8], %4 {strides = array<i32>} : memref<4x23x19xf32, #tpu.memory_space<vmem>>, vector<4x4x19xf32>,
    %cst_9 = arith.constant 0.000000e+00 : f32
    %6 = vector.broadcast %cst_9 : f32 to vector<4x16x1xf32>
    %c0_10 = arith.constant 0 : index
    %c3_11 = arith.constant 3 : index
    %c0_12 = arith.constant 0 : index
    %7 = vector.load %arg2[%c0_10, %c3_11, %c0_12] : memref<4x23x19xf32, #tpu.memory_space<vmem>>, vector<4x16x1xf32>
    tpu.vector_store %arg2[%c0_10, %c3_11, %c0_12], %6 {strides = array<i32>} : memref<4x23x19xf32, #tpu.memory_space<vmem>>, vector<4x16x1xf32>,
    %cst_13 = arith.constant 0.000000e+00 : f32
    %8 = vector.broadcast %cst_13 : f32 to vector<4x16x2xf32>
    %c0_14 = arith.constant 0 : index
    %c3_15 = arith.constant 3 : index
    %c17 = arith.constant 17 : index
    %9 = vector.load %arg2[%c0_14, %c3_15, %c17] : memref<4x23x19xf32, #tpu.memory_space<vmem>>, vector<4x16x2xf32>
    tpu.vector_store %arg2[%c0_14, %c3_15, %c17], %8 {strides = array<i32>} : memref<4x23x19xf32, #tpu.memory_space<vmem>>, vector<4x16x2xf32>,
    return
  }
  func.func @transform_0(%arg0: i32) -> (i32, i32, i32) {
    %c0_i32 = arith.constant 0 : i32
    %c0_i32_0 = arith.constant 0 : i32
    %c0_i32_1 = arith.constant 0 : i32
    return %arg0, %c0_i32, %c0_i32_0 : i32, i32, i32
  }
  func.func @transform_1(%arg0: i32) -> (i32, i32, i32) {
    %c0_i32 = arith.constant 0 : i32
    %c0_i32_0 = arith.constant 0 : i32
    %c0_i32_1 = arith.constant 0 : i32
    return %arg0, %c0_i32, %c0_i32_0 : i32, i32, i32
  }
}

</mosaic_0001>

<llo_original>
// kernel: tpu_custom_call.1
$region0: #{tpu_custom_call.1}
  #allocation0 [shape = 'u32[]', space=smem, size = 0x4, offset = 0x4, fixed_abs, tag = 'smem constant byte address 0x4 - core index']
  #allocation1 [shape = 'u32[144,128]{1,0:T(1,128)}', space=vmem, size = 0x12000, scoped, tag = 'internal scratch']
  %s0 = inlined_call_operand.hbm [shape: f32[8,16,16], index: 0, kind: input, shape index: {}]
  %s1 = inlined_call_operand.vmem [shape: f32[8,23,19], index: 1, kind: output, shape index: {}]
  %s2 = sld [smem:[#allocation0]]
  $region41: #{tpu_custom_call.1} parent=0
    _
  %s4 = ssub.s32 1, %s2
  %s5 = scalar_select 0, %s4, %s2
  $region1: #{tpu_custom_call.1} parent=0
    #allocation2 [shape = 'u8[65536]{0}', space=vmem, size = 0x10000, scoped, tag = 'input window, operand 0']
    #allocation3 [shape = 's32[2]{0}', space=sflag, size = 0x8, scoped, tag = 'scoped memory for tpu_custom_call.1']
    %6 = vsyncpa [#allocation3], 0
    %s7 = scalar_lea.sflag [#allocation3], 1
    %8 = vsyncpa %s7, 0
    loop: start=0, step=1, limit=4
    $region2: #{tpu_custom_call.1} parent=1 // loop_pre_header
      _
    $region3: #{tpu_custom_call.1} parent=1 // loop_header
      %s10 = sphi 0, %s14
      %p11 = scmp.ge.s32.totalorder %s10, 4
      %s20 = sphi 0, %s22
      %s23 = sphi 0, %s20
      %s24 = sphi 0, %s23
      %s40 = sphi 0, %s24
      %s46 = sphi 0, %s48
      %s49 = sphi 0, %s46
      %s50 = sphi 0, %s49
      %s66 = sphi 0, %s50
    $region4: #{tpu_custom_call.1} parent=1 // loop_header_branch
      %13 = sbr.rel (%p11) target = $region8
    $region5: #{tpu_custom_call.1} parent=1 // loop_body
      %s15 = ssub.s32 %s10, 1
      %s16 = ssub.s32 %s10, 2
      %s17 = sadd.s32 %s10, 1
      %s18 = ssub.s32 %s10, %s17
      %p19 = scmp.eq.s32.totalorder %s18, 0
      %s21 = sadd.s32 %s20, 1
      %s22 = scalar_select %p19, %s20, %s21
      %p25 = pneg %p19
      %p26 = scmp.eq.s32.totalorder %s10, 1
      %p27 = por %p25, %p26
      %p28 = scmp.ne.s32.totalorder %s20, %s23
      %p29 = scmp.eq.s32.totalorder %s10, 0
      %p30 = por %p28, %p29
      %p31 = scmp.ne.s32.totalorder %s20, %s23
      %p32 = scmp.eq.s32.totalorder %s15, 1
      %p33 = por %p31, %p32
      %p34 = scmp.ne.s32.totalorder %s23, %s24
      %p35 = scmp.eq.s32.totalorder %s15, 0
      %p36 = por %p34, %p35
      %p37 = scmp.ne.s32.totalorder %s23, %s24
      %p38 = scmp.eq.s32.totalorder %s16, 1
      %p39 = por %p37, %p38
      %p41 = scmp.ne.s32.totalorder %s24, %s40
      %p42 = scmp.eq.s32.totalorder %s16, 0
      %p43 = por %p41, %p42
      %s44 = ssub.s32 %s10, %s17
      %p45 = scmp.eq.s32.totalorder %s44, 0
      %s47 = sadd.s32 %s46, 1
      %s48 = scalar_select %p45, %s46, %s47
      %p51 = pneg %p45
      %p52 = scmp.eq.s32.totalorder %s10, 1
      %p53 = por %p51, %p52
      %p54 = scmp.ne.s32.totalorder %s46, %s49
      %p55 = scmp.eq.s32.totalorder %s10, 0
      %p56 = por %p54, %p55
      %p57 = scmp.ne.s32.totalorder %s46, %s49
      %p58 = scmp.eq.s32.totalorder %s15, 1
      %p59 = por %p57, %p58
      %p60 = scmp.ne.s32.totalorder %s49, %s50
      %p61 = scmp.eq.s32.totalorder %s15, 0
      %p62 = por %p60, %p61
      %p63 = scmp.ne.s32.totalorder %s49, %s50
      %p64 = scmp.eq.s32.totalorder %s16, 1
      %p65 = por %p63, %p64
      %p67 = scmp.ne.s32.totalorder %s50, %s66
      %p68 = scmp.eq.s32.totalorder %s16, 0
      %p69 = por %p67, %p68
      %p70 = scmp.le.s32.totalorder 1, %s10
      %p71 = scmp.lt.s32.totalorder %s10, 3
      %p72 = pnand %p70, %p71
      %p73 = pneg %p72
      // Predicated region
      $region9: #{tpu_custom_call.1} parent=5 // pred_check
        _
      $region10: #{tpu_custom_call.1} parent=5 // pred_check_branch
        %75 = sbr.rel (%p72) target = $region12
      $region11: #{tpu_custom_call.1} parent=5 // pred_region
        %s76 = ssub.s32 %s10, 1
      $region12: #{tpu_custom_call.1} parent=5 // pred_fallthru
        _
      %p77 = scmp.lt.s32.totalorder %s10, 2
      // Predicated region
      $region13: #{tpu_custom_call.1} parent=5 // pred_check
        %p78 = pneg %p77
      $region14: #{tpu_custom_call.1} parent=5 // pred_check_branch
        %80 = sbr.rel (%p78) target = $region16
      $region15: #{tpu_custom_call.1} parent=5 // pred_region
        // Predicated region
        $region17: #{tpu_custom_call.1} parent=15 // pred_check
          %p81 = pneg %p30
        $region18: #{tpu_custom_call.1} parent=15 // pred_check_branch
          %83 = sbr.rel (%p81) target = $region20
        $region19: #{tpu_custom_call.1} parent=15 // pred_region
          %s84 = sand.u32 %s20, 1
          %s85 = scalar_lea.sflag [#allocation3], %s84
          %s86 = sand.u32 %s20, 1
          %s87 = smul.addr %s86, 64
          %s88 = scalar_lea.vmem [#allocation2], %s87
          %s89 = smul.u32 4, %s10
          %s91 = ssub.s32 1024, 1024
          %92 = vsyncadd %s85, %s91
          %s93 = smul.addr %s89, 2
          %s94 = smul.addr %s93, 128
          %s95 = scalar_lea.hbm %s0, %s94
          %s96 = sshll.u32 %s88, 4
          %s97 = int_to_ptr.vmem [resolvable:$true] %s96
          %102 = dma.hbm_to_vmem [thread:$0]  %s95, 1024, %s97, %s85, 128, 128, 8
        $region20: #{tpu_custom_call.1} parent=15 // pred_fallthru
          _
      $region16: #{tpu_custom_call.1} parent=5 // pred_fallthru
        _
      %p103 = scmp.le.s32.totalorder 1, %s10
      %p104 = scmp.lt.s32.totalorder %s10, 3
      %p105 = pnand %p103, %p104
      %p106 = pneg %p105
      // Predicated region
      $region21: #{tpu_custom_call.1} parent=5 // pred_check
        _
      $region22: #{tpu_custom_call.1} parent=5 // pred_check_branch
        %108 = sbr.rel (%p105) target = $region24
      $region23: #{tpu_custom_call.1} parent=5 // pred_region
        %s109 = ssub.s32 %s10, 1
        %s110 = sand.u32 %s23, 1
        %s111 = scalar_lea.sflag [#allocation3], %s110
        %s112 = sand.u32 %s23, 1
        %s113 = smul.addr %s112, 64
        %s114 = scalar_lea.vmem [#allocation2], %s113
        // Predicated region
        $region25: #{tpu_custom_call.1} parent=23 // pred_check
          %p115 = pneg %p36
        $region26: #{tpu_custom_call.1} parent=23 // pred_check_branch
          %117 = sbr.rel (%p115) target = $region28
        $region27: #{tpu_custom_call.1} parent=23 // pred_region
          %118 = dma.done %s111, 1024
        $region28: #{tpu_custom_call.1} parent=23 // pred_fallthru
          _
        %s119 = sand.u32 %s23, 1
        %s120 = scalar_lea.sflag [#allocation3], %s119
        %s121 = sand.u32 %s23, 1
        %s122 = smul.addr %s121, 64
        %s123 = scalar_lea.vmem [#allocation2], %s122
        %p124 = pneg %p36
        %p125 = pneg %p33
        %p126 = pneg %p62
        %p127 = pneg %p59
        %s128 = smul.u32 4, %s15
        %p129 = scmp.lt.s32.totalorder %s128, 7
        %s130 = scalar_select %p129, %s128, 7
        %s131 = smul.addr %s130, 3
        %s132 = smul.addr %s131, 8
        %s133 = scalar_lea.vmem %s1, %s132
        %s134 = smul.u32 4, %s15
        %s135 = smul.u32 4, %s15
        %p136 = scmp.lt.s32.totalorder %s135, 7
        %s137 = scalar_select %p136, %s135, 7
        %s138 = smul.addr %s137, 3
        %s139 = smul.addr %s138, 8
        %s140 = scalar_lea.vmem %s1, %s139
        %s141 = smul.u32 4, %s15
        %v142 = vld [vmem:[%s114] sm:$0xff]
        %v143 = vld [vmem:[%s114 + $0x8] sm:$0xff]
        %v144 = vld [vmem:[%s114 + $0x10] sm:$0xff]
        %v145 = vld [vmem:[%s114 + $0x18] sm:$0xff]
        %v146 = vld [vmem:[%s114 + $0x20] sm:$0xff]
        %v147 = vld [vmem:[%s114 + $0x28] sm:$0xff]
        %v148 = vld [vmem:[%s114 + $0x30] sm:$0xff]
        %v149 = vld [vmem:[%s114 + $0x38] sm:$0xff]
        %158 = vrot.lane.b32.xlu0 %v142, 1
        %v159 = vpop.permute.xlu0 %158
        %160 = vrot.lane.b32.xlu0 %v143, 1
        %v161 = vpop.permute.xlu0 %160
        %162 = vrot.lane.b32.xlu0 %v144, 1
        %v163 = vpop.permute.xlu0 %162
        %164 = vrot.lane.b32.xlu0 %v145, 1
        %v165 = vpop.permute.xlu0 %164
        %166 = vrot.lane.b32.xlu0 %v146, 1
        %v167 = vpop.permute.xlu0 %166
        %168 = vrot.lane.b32.xlu0 %v147, 1
        %v169 = vpop.permute.xlu0 %168
        %170 = vrot.lane.b32.xlu0 %v148, 1
        %v171 = vpop.permute.xlu0 %170
        %172 = vrot.lane.b32.xlu0 %v149, 1
        %v173 = vpop.permute.xlu0 %172
        %vm182 = vcmask 138248
        %183 = vst.msk [vmem:[%s140 + $0x3] sm:$0xff] %vm182, %v159
        %184 = vst.msk [vmem:[%s140 + $0xb] sm:$0xff] %vm182, %v161
        %185 = vst.msk [vmem:[%s140 + $0x1b] sm:$0xff] %vm182, %v163
        %186 = vst.msk [vmem:[%s140 + $0x23] sm:$0xff] %vm182, %v165
        %187 = vst.msk [vmem:[%s140 + $0x33] sm:$0xff] %vm182, %v167
        %188 = vst.msk [vmem:[%s140 + $0x3b] sm:$0xff] %vm182, %v169
        %189 = vst.msk [vmem:[%s140 + $0x4b] sm:$0xff] %vm182, %v171
        %190 = vst.msk [vmem:[%s140 + $0x53] sm:$0xff] %vm182, %v173
        %vm191 = vcmask 149504
        %192 = vst.msk [vmem:[%s140] sm:$0x7] %vm191, 0.0
        %193 = vst.msk [vmem:[%s140 + $0x18] sm:$0x7] %vm191, 0.0
        %194 = vst.msk [vmem:[%s140 + $0x30] sm:$0x7] %vm191, 0.0
        %195 = vst.msk [vmem:[%s140 + $0x48] sm:$0x7] %vm191, 0.0
        %vm196 = vcmask 150528
        %197 = vst.msk [vmem:[%s140 + $0x13] sm:$0xf] %vm196, 0.0
        %198 = vst.msk [vmem:[%s140 + $0x2b] sm:$0xf] %vm196, 0.0
        %199 = vst.msk [vmem:[%s140 + $0x43] sm:$0xf] %vm196, 0.0
        %200 = vst.msk [vmem:[%s140 + $0x5b] sm:$0xf] %vm196, 0.0
        %vm201 = vcmask 7168
        %202 = vst.msk [vmem:[%s140 + $0x3] sm:$0xff] %vm201, 0.0
        %203 = vst.msk [vmem:[%s140 + $0xb] sm:$0xff] %vm201, 0.0
        %204 = vst.msk [vmem:[%s140 + $0x1b] sm:$0xff] %vm201, 0.0
        %205 = vst.msk [vmem:[%s140 + $0x23] sm:$0xff] %vm201, 0.0
        %206 = vst.msk [vmem:[%s140 + $0x33] sm:$0xff] %vm201, 0.0
        %207 = vst.msk [vmem:[%s140 + $0x3b] sm:$0xff] %vm201, 0.0
        %208 = vst.msk [vmem:[%s140 + $0x4b] sm:$0xff] %vm201, 0.0
        %209 = vst.msk [vmem:[%s140 + $0x53] sm:$0xff] %vm201, 0.0
        %vm210 = vcmask 154760
        %211 = vst.msk [vmem:[%s140 + $0x3] sm:$0xff] %vm210, 0.0
        %212 = vst.msk [vmem:[%s140 + $0xb] sm:$0xff] %vm210, 0.0
        %213 = vst.msk [vmem:[%s140 + $0x1b] sm:$0xff] %vm210, 0.0
        %214 = vst.msk [vmem:[%s140 + $0x23] sm:$0xff] %vm210, 0.0
        %215 = vst.msk [vmem:[%s140 + $0x33] sm:$0xff] %vm210, 0.0
        %216 = vst.msk [vmem:[%s140 + $0x3b] sm:$0xff] %vm210, 0.0
        %217 = vst.msk [vmem:[%s140 + $0x4b] sm:$0xff] %vm210, 0.0
        %218 = vst.msk [vmem:[%s140 + $0x53] sm:$0xff] %vm210, 0.0
        %s219 = smul.u32 4, %s15
        %p220 = scmp.lt.s32.totalorder %s219, 7
        %s221 = scalar_select %p220, %s219, 7
        %s222 = smul.addr %s221, 3
        %s223 = smul.addr %s222, 8
        %s224 = scalar_lea.vmem %s1, %s223
        // Predicated region
        $region29: #{tpu_custom_call.1} parent=23 // pred_check
          %p225 = pneg %p59
        $region30: #{tpu_custom_call.1} parent=23 // pred_check_branch
          %227 = sbr.rel (%p225) target = $region32
        $region31: #{tpu_custom_call.1} parent=23 // pred_region
          %s228 = smul.u32 4, %s15
        $region32: #{tpu_custom_call.1} parent=23 // pred_fallthru
          _
      $region24: #{tpu_custom_call.1} parent=5 // pred_fallthru
        _
      %p229 = scmp.le.s32.totalorder 2, %s10
      // Predicated region
      $region33: #{tpu_custom_call.1} parent=5 // pred_check
        %p230 = pneg %p229
      $region34: #{tpu_custom_call.1} parent=5 // pred_check_branch
        %232 = sbr.rel (%p230) target = $region36
      $region35: #{tpu_custom_call.1} parent=5 // pred_region
        %s233 = ssub.s32 %s10, 2
        // Predicated region
        $region37: #{tpu_custom_call.1} parent=35 // pred_check
          %p234 = pneg %p65
        $region38: #{tpu_custom_call.1} parent=35 // pred_check_branch
          %236 = sbr.rel (%p234) target = $region40
        $region39: #{tpu_custom_call.1} parent=35 // pred_region
          %s237 = smul.u32 4, %s16
          %p238 = scmp.lt.s32.totalorder %s237, 7
          %s239 = scalar_select %p238, %s237, 7
          %s240 = smul.addr %s239, 3
          %s241 = smul.addr %s240, 8
          %s242 = scalar_lea.vmem %s1, %s241
        $region40: #{tpu_custom_call.1} parent=35 // pred_fallthru
          _
      $region36: #{tpu_custom_call.1} parent=5 // pred_fallthru
        _
    $region6: #{tpu_custom_call.1} parent=1 // loop_footer
      %s14 = sadd.s32 1, %s10
    $region7: #{tpu_custom_call.1} parent=1 // loop_footer_branch
      %9 = sbr.rel target = $region3
    $region8: #{tpu_custom_call.1} parent=1 // loop_exit
      _
    %243 = vsyncpa [#allocation3], 1
    %s244 = scalar_lea.sflag [#allocation3], 1
    %245 = vsyncpa %s244, 1

</llo_original>
